<compile_context>
chip_gen: v7x
topology: tpu7x:2x2x1
jax: 0.10.0
libtpu: 0.0.40
codegen_flags: <defaults>
</compile_context>

<pallas_src>
import math
import functools

import jax
import jax.numpy as jnp
from jax import lax
from jax.experimental import pallas as pl
from jax.experimental.pallas import tpu as pltpu

EPS = 1e-12  # matches torch F.normalize default eps


def _arc_margin_kernel(label_ref, x_ref, w_ref, out_ref, xn_ref, *,
                       s, cos_m, sin_m, th, mm, easy_margin, tile_c, mxu_dtype):
    j = pl.program_id(1)

    # --- normalize the resident x tile once per B-tile, cache in VMEM scratch
    @pl.when(j == 0)
    def _():
        x = x_ref[...].astype(jnp.float32)                      # (TB, D)
        inv = lax.rsqrt(jnp.maximum(jnp.sum(x * x, axis=-1, keepdims=True),
                                    EPS * EPS))
        xn_ref[...] = (x * inv).astype(xn_ref.dtype)

    # --- normalize the streamed weight tile (touched once per (i, j) anyway)
    w = w_ref[...].astype(jnp.float32)                          # (TC, D)
    w_inv = lax.rsqrt(jnp.maximum(jnp.sum(w * w, axis=-1, keepdims=True),
                                  EPS * EPS))
    w_n = (w * w_inv).astype(mxu_dtype)

    # --- cosine = x_n @ w_n^T, contracting the shared D axis (no transpose)
    cosine = lax.dot_general(
        xn_ref[...], w_n,
        dimension_numbers=(((1,), (1,)), ((), ())),
        preferred_element_type=jnp.float32)                     # (TB, TC) f32

    # --- one-hot of the GLOBAL class index within this C tile
    tb, tc = cosine.shape
    col = lax.broadcasted_iota(jnp.int32, (tb, tc), 1) + j * tile_c
    one_hot = (col == label_ref[...]).astype(jnp.float32)       # (TB, TC)

    # --- margin only affects the label column: do sqrt/where on (TB, 1)
    cos_l = jnp.sum(one_hot * cosine, axis=-1, keepdims=True)   # (TB, 1)
    sin_l = jnp.sqrt(jnp.maximum(1.0 - cos_l * cos_l, 0.0))
    phi_l = cos_l * cos_m - sin_l * sin_m
    if easy_margin:
        phi_l = jnp.where(cos_l > 0.0, phi_l, cos_l)
    else:
        phi_l = jnp.where(cos_l > th, phi_l, cos_l - mm)

    out_ref[...] = ((cosine + one_hot * (phi_l - cos_l)) * s).astype(out_ref.dtype)


def _pick_tile(n, target, align):
    """Largest multiple of `align` that divides n and is <= target, else n."""
    if n <= target:
        return n
    t = (target // align) * align
    while t >= align:
        if n % t == 0:
            return t
        t -= align
    return n  # fall back to the full dimension (always legal for BlockSpec)


def arc_margin_product(x, weight, label, *, s=30.0, m=0.5, easy_margin=False,
                       use_bf16_matmul=True, tile_b=128, tile_c=2048):
    """x: (B, in_features) f32, weight: (out_features, in_features) f32,
    label: (B,) int. Returns (B, out_features) f32."""
    B, D = x.shape
    C, D2 = weight.shape
    assert D == D2
    label2d = label.reshape(B, 1).astype(jnp.int32)

    TB = _pick_tile(B, tile_b, 8)       # sublane-aligned batch tile
    TC = _pick_tile(C, tile_c, 128)     # lane-dense class tile
    mxu_dtype = jnp.bfloat16 if use_bf16_matmul else jnp.float32

    kernel = functools.partial(
        _arc_margin_kernel,
        s=float(s),
        cos_m=math.cos(m),
        sin_m=math.sin(m),
        th=math.cos(math.pi - m),
        mm=math.sin(math.pi - m) * m,
        easy_margin=easy_margin,
        tile_c=TC,
        mxu_dtype=mxu_dtype,
    )

    # VMEM budget: double-buffered x/w/out/label tiles + x_n scratch (+ margin).
    mxu_bytes = 2 if use_bf16_matmul else 4
    vmem_est = (2 * ((TB * D + TC * D + TB * TC) * 4 + TB * 4)
                + TB * D * mxu_bytes)
    vmem_limit = int(min(max(2 * vmem_est, 16 * 2**20), 96 * 2**20))

    grid = (B // TB, C // TC)

    return pl.pallas_call(
        kernel,
        out_shape=jax.ShapeDtypeStruct((B, C), jnp.float32),
        grid=grid,
        in_specs=[
            pl.BlockSpec((TB, 1), lambda i, j: (i, 0)),   # label (resident per i)
            pl.BlockSpec((TB, D), lambda i, j: (i, 0)),   # x (resident across j)
            pl.BlockSpec((TC, D), lambda i, j: (j, 0)),   # weight (streamed)
        ],
        out_specs=pl.BlockSpec((TB, TC), lambda i, j: (i, j)),
        scratch_shapes=[pltpu.VMEM((TB, D), mxu_dtype)],  # cached x_n
        compiler_params=pltpu.CompilerParams(
            # j must be "arbitrary": the cached x_n scratch is written at j==0
            # and reused for j>0, so the C axis may not be core-sharded.
            dimension_semantics=("parallel", "arbitrary"),
            vmem_limit_bytes=vmem_limit),
    )(label2d, x, weight)


def _reference(x, weight, label, *, s=30.0, m=0.5, easy_margin=False,
               mxu_dtype=jnp.float32):
    """Pure-JAX reference mirroring the PyTorch forward.
    `mxu_dtype` lets us match the kernel's bf16 matmul operands exactly."""
    x_n = x / jnp.maximum(jnp.linalg.norm(x, axis=-1, keepdims=True), EPS)
    w_n = weight / jnp.maximum(jnp.linalg.norm(weight, axis=-1, keepdims=True), EPS)
    cosine = jnp.dot(x_n.astype(mxu_dtype), w_n.astype(mxu_dtype).T,
                     preferred_element_type=jnp.float32)
    sine = jnp.sqrt(jnp.clip(1.0 - cosine ** 2, 0.0, 1.0))
    phi = cosine * math.cos(m) - sine * math.sin(m)
    if easy_margin:
        phi = jnp.where(cosine > 0, phi, cosine)
    else:
        phi = jnp.where(cosine > math.cos(math.pi - m), phi,
                        cosine - math.sin(math.pi - m) * m)
    one_hot = jax.nn.one_hot(label, weight.shape[0], dtype=cosine.dtype)
    return (one_hot * phi + (1.0 - one_hot) * cosine) * s


if __name__ == "__main__":
    B = 8             # batch
    IN_FEATURES = 64
    OUT_FEATURES = 128

    key = jax.random.PRNGKey(0)
    kx, kw, kl = jax.random.split(key, 3)

    x = jax.random.normal(kx, (B, IN_FEATURES), dtype=jnp.float32)

    # xavier_uniform_ for weight of shape (out_features, in_features)
    bound = math.sqrt(6.0 / (IN_FEATURES + OUT_FEATURES))
    weight = jax.random.uniform(kw, (OUT_FEATURES, IN_FEATURES),
                                dtype=jnp.float32, minval=-bound, maxval=bound)

    label = jax.random.randint(kl, (B,), 0, OUT_FEATURES, dtype=jnp.int32)

    out = arc_margin_product(x, weight, label)
    out = jax.block_until_ready(out)
    assert out.shape == (B, OUT_FEATURES)

    # Tight check against a reference using the same bf16 matmul operands.
    ref_bf16 = _reference(x, weight, label, mxu_dtype=jnp.bfloat16)
    assert jnp.allclose(out, ref_bf16, atol=2e-3, rtol=2e-3), \
        "mismatch vs bf16-matmul reference"

    # Loose check against the pure-f32 PyTorch-equivalent reference
    # (bf16 MXU operands introduce ~0.4% relative error; outputs scale with s).
    ref_f32 = _reference(x, weight, label)
    assert jnp.allclose(out, ref_f32, atol=1.5e-1, rtol=1e-2), \
        "mismatch vs f32 reference"

    print("KERNEL_OK")
</pallas_src>

<mosaic_0001>
module attributes {stable_mosaic.version = 11 : i64} {
  func.func @_arc_margin_kernel(%arg0: i32, %arg1: i32, %arg2: memref<8x1xi32, #tpu.memory_space<vmem>>, %arg3: memref<8x64xf32, #tpu.memory_space<vmem>>, %arg4: memref<128x64xf32, #tpu.memory_space<vmem>>, %arg5: memref<8x128xf32, #tpu.memory_space<vmem>>, %arg6: memref<8x64xbf16, #tpu.memory_space<vmem>>) attributes {dimension_semantics = [#tpu.dimension_semantics<parallel>, #tpu.dimension_semantics<arbitrary>], iteration_bounds = array<i64: 1, 1>, scalar_prefetch = 0 : i64, scratch_operands = 1 : i64, tpu.core_type = #tpu.core_type<tc>, window_params = [{transform_indices = @transform_0, window_bounds = array<i64: 8, 1>}, {transform_indices = @transform_1, window_bounds = array<i64: 8, 64>}, {transform_indices = @transform_2, window_bounds = array<i64: 128, 64>}, {transform_indices = @transform_3, window_bounds = array<i64: 8, 128>}]} {
    %c0_i32 = arith.constant 0 : i32
    %0 = arith.cmpi eq, %arg1, %c0_i32 : i32
    %1 = arith.extui %0 : i1 to i32
    %c0_i32_0 = arith.constant 0 : i32
    %2 = arith.cmpi ne, %1, %c0_i32_0 : i32
    scf.if %2 {
      %c0_18 = arith.constant 0 : index
      %c0_19 = arith.constant 0 : index
      %50 = vector.load %arg3[%c0_18, %c0_19] : memref<8x64xf32, #tpu.memory_space<vmem>>, vector<8x64xf32>
      %51 = arith.mulf %50, %50 : vector<8x64xf32>
      %cst_20 = arith.constant dense<0.000000e+00> : vector<8xf32>
      %52 = vector.multi_reduction <add>, %51, %cst_20 [1] : vector<8x64xf32> to vector<8xf32>
      %53 = vector.shape_cast %52 : vector<8xf32> to vector<8x1xf32>
      %cst_21 = arith.constant 1.000000e-24 : f32
      %54 = vector.broadcast %cst_21 : f32 to vector<8x1xf32>
      %55 = arith.maximumf %53, %54 : vector<8x1xf32>
      %56 = math.rsqrt %55 : vector<8x1xf32>
      %57 = vector.broadcast %56 : vector<8x1xf32> to vector<8x64xf32>
      %58 = arith.mulf %50, %57 : vector<8x64xf32>
      %59 = arith.truncf %58 : vector<8x64xf32> to vector<8x64xbf16>
      %c0_22 = arith.constant 0 : index
      %c0_23 = arith.constant 0 : index
      %60 = vector.load %arg6[%c0_22, %c0_23] : memref<8x64xbf16, #tpu.memory_space<vmem>>, vector<8x64xbf16>
      tpu.vector_store %arg6[%c0_22, %c0_23], %59 {strides = array<i32>} : memref<8x64xbf16, #tpu.memory_space<vmem>>, vector<8x64xbf16>,
    } else {
    }
    %c0 = arith.constant 0 : index
    %c0_1 = arith.constant 0 : index
    %3 = vector.load %arg4[%c0, %c0_1] : memref<128x64xf32, #tpu.memory_space<vmem>>, vector<128x64xf32>
    %4 = arith.mulf %3, %3 : vector<128x64xf32>
    %cst = arith.constant dense<0.000000e+00> : vector<128xf32>
    %5 = vector.multi_reduction <add>, %4, %cst [1] : vector<128x64xf32> to vector<128xf32>
    %6 = vector.shape_cast %5 : vector<128xf32> to vector<128x1xf32>
    %cst_2 = arith.constant 1.000000e-24 : f32
    %7 = vector.broadcast %cst_2 : f32 to vector<128x1xf32>
    %8 = arith.maximumf %6, %7 : vector<128x1xf32>
    %9 = math.rsqrt %8 : vector<128x1xf32>
    %10 = vector.broadcast %9 : vector<128x1xf32> to vector<128x64xf32>
    %11 = arith.mulf %3, %10 : vector<128x64xf32>
    %12 = arith.truncf %11 : vector<128x64xf32> to vector<128x64xbf16>
    %c0_3 = arith.constant 0 : index
    %c0_4 = arith.constant 0 : index
    %13 = vector.load %arg6[%c0_3, %c0_4] : memref<8x64xbf16, #tpu.memory_space<vmem>>, vector<8x64xbf16>
    %cst_5 = arith.constant dense<0.000000e+00> : vector<8x128xf32>
    %14 = tpu.matmul %13, %12, %cst_5 {dimension_numbers = #tpu.dot_dimension_numbers<[1], [1], [0], [0], [0, 0, 1, 0], [], []>} : vector<8x64xbf16>, vector<128x64xbf16>, vector<8x128xf32> -> vector<8x128xf32>
    %15 = tpu.iota {dimensions = array<i32: 1>} : vector<8x128xi32>
    %c128_i32 = arith.constant 128 : i32
    %16 = arith.muli %arg1, %c128_i32 : i32
    %17 = vector.broadcast %16 : i32 to vector<8x128xi32>
    %18 = arith.addi %15, %17 : vector<8x128xi32>
    %c0_6 = arith.constant 0 : index
    %c0_7 = arith.constant 0 : index
    %19 = vector.load %arg2[%c0_6, %c0_7] : memref<8x1xi32, #tpu.memory_space<vmem>>, vector<8x1xi32>
    %20 = vector.broadcast %19 : vector<8x1xi32> to vector<8x128xi32>
    %21 = arith.cmpi eq, %18, %20 : vector<8x128xi32>
    %22 = arith.extui %21 : vector<8x128xi1> to vector<8x128xi32>
    %23 = arith.sitofp %22 : vector<8x128xi32> to vector<8x128xf32>
    %24 = arith.mulf %23, %14 : vector<8x128xf32>
    %cst_8 = arith.constant dense<0.000000e+00> : vector<8xf32>
    %25 = vector.multi_reduction <add>, %24, %cst_8 [1] : vector<8x128xf32> to vector<8xf32>
    %26 = vector.shape_cast %25 : vector<8xf32> to vector<8x1xf32>
    %27 = arith.mulf %26, %26 : vector<8x1xf32>
    %cst_9 = arith.constant 1.000000e+00 : f32
    %28 = vector.broadcast %cst_9 : f32 to vector<8x1xf32>
    %29 = arith.subf %28, %27 : vector<8x1xf32>
    %cst_10 = arith.constant 0.000000e+00 : f32
    %30 = vector.broadcast %cst_10 : f32 to vector<8x1xf32>
    %31 = arith.maximumf %29, %30 : vector<8x1xf32>
    %32 = math.sqrt %31 : vector<8x1xf32>
    %cst_11 = arith.constant 0.87758255 : f32
    %33 = vector.broadcast %cst_11 : f32 to vector<8x1xf32>
    %34 = arith.mulf %26, %33 : vector<8x1xf32>
    %cst_12 = arith.constant 0.47942555 : f32
    %35 = vector.broadcast %cst_12 : f32 to vector<8x1xf32>
    %36 = arith.mulf %32, %35 : vector<8x1xf32>
    %37 = arith.subf %34, %36 : vector<8x1xf32>
    %cst_13 = arith.constant -0.87758255 : f32
    %38 = vector.broadcast %cst_13 : f32 to vector<8x1xf32>
    %39 = arith.cmpf ogt, %26, %38 : vector<8x1xf32>
    %cst_14 = arith.constant 0.239712775 : f32
    %40 = vector.broadcast %cst_14 : f32 to vector<8x1xf32>
    %41 = arith.subf %26, %40 : vector<8x1xf32>
    %42 = arith.select %39, %37, %41 : vector<8x1xi1>, vector<8x1xf32>
    %43 = arith.subf %42, %26 : vector<8x1xf32>
    %44 = vector.broadcast %43 : vector<8x1xf32> to vector<8x128xf32>
    %45 = arith.mulf %23, %44 : vector<8x128xf32>
    %46 = arith.addf %14, %45 : vector<8x128xf32>
    %cst_15 = arith.constant 3.000000e+01 : f32
    %47 = vector.broadcast %cst_15 : f32 to vector<8x128xf32>
    %48 = arith.mulf %46, %47 : vector<8x128xf32>
    %c0_16 = arith.constant 0 : index
    %c0_17 = arith.constant 0 : index
    %49 = vector.load %arg5[%c0_16, %c0_17] : memref<8x128xf32, #tpu.memory_space<vmem>>, vector<8x128xf32>
    tpu.vector_store %arg5[%c0_16, %c0_17], %48 {strides = array<i32>} : memref<8x128xf32, #tpu.memory_space<vmem>>, vector<8x128xf32>,
    return
  }
  func.func @transform_0(%arg0: i32, %arg1: i32) -> (i32, i32) {
    %c0_i32 = arith.constant 0 : i32
    %c0_i32_0 = arith.constant 0 : i32
    return %arg0, %c0_i32 : i32, i32
  }
  func.func @transform_1(%arg0: i32, %arg1: i32) -> (i32, i32) {
    %c0_i32 = arith.constant 0 : i32
    %c0_i32_0 = arith.constant 0 : i32
    return %arg0, %c0_i32 : i32, i32
  }
  func.func @transform_2(%arg0: i32, %arg1: i32) -> (i32, i32) {
    %c0_i32 = arith.constant 0 : i32
    %c0_i32_0 = arith.constant 0 : i32
    return %arg1, %c0_i32 : i32, i32
  }
  func.func @transform_3(%arg0: i32, %arg1: i32) -> (i32, i32) {
    %c0_i32 = arith.constant 0 : i32
    return %arg0, %arg1 : i32, i32
  }
}

</mosaic_0001>

<llo_original>
// kernel: tpu_custom_call.1
$region0: #{tpu_custom_call.1}
  #allocation0 [shape = 'u32[]', space=smem, size = 0x4, offset = 0x4, fixed_abs, tag = 'smem constant byte address 0x4 - core index']
  #allocation1 [shape = 'u32[144,128]{1,0:T(1,128)}', space=vmem, size = 0x12000, scoped, tag = 'internal scratch']
  #allocation2 [shape = 'bf16[8,64]{1,0:T(8,128)(2,1)}', space=vmem, size = 0x800, scoped, tag = 'scratch operand']
  %s0 = inlined_call_operand.vmem [shape: s32[8,1], index: 0, kind: input, shape index: {}]
  %s1 = inlined_call_operand.vmem [shape: f32[8,64], index: 1, kind: input, shape index: {}]
  %s2 = inlined_call_operand.vmem [shape: f32[128,64], index: 2, kind: input, shape index: {}]
  %s3 = inlined_call_operand.hbm [shape: f32[8,128], index: 3, kind: output, shape index: {}]
  %s4 = sld [smem:[#allocation0]]
  $region26: #{tpu_custom_call.1} parent=0
    _
  %s6 = ssub.s32 1, %s4
  %s7 = scalar_select 0, %s6, %s4
  $region1: #{tpu_custom_call.1} parent=0
    #allocation3 [shape = 'u8[4096]{0}', space=vmem, size = 0x1000, scoped, tag = 'output window, operand 0, single buffered']
    #allocation4 [shape = 's32[1]{0}', space=sflag, size = 0x4, scoped, tag = 'scoped memory for tpu_custom_call.1']
    %8 = vsyncpa [#allocation4], 0
    // Predicated region
    $region2: #{tpu_custom_call.1} parent=1 // pred_check
      _
    $region3: #{tpu_custom_call.1} parent=1 // pred_check_branch
      %10 = sbr.rel (0) target = $region5
    $region4: #{tpu_custom_call.1} parent=1 // pred_region
      _
    $region5: #{tpu_custom_call.1} parent=1 // pred_fallthru
      _
    // Predicated region
    $region6: #{tpu_custom_call.1} parent=1 // pred_check
      _
    $region7: #{tpu_custom_call.1} parent=1 // pred_check_branch
      %12 = sbr.rel (0) target = $region9
    $region8: #{tpu_custom_call.1} parent=1 // pred_region
      _
    $region9: #{tpu_custom_call.1} parent=1 // pred_fallthru
      _
    // Predicated region
    $region10: #{tpu_custom_call.1} parent=1 // pred_check
      _
    $region11: #{tpu_custom_call.1} parent=1 // pred_check_branch
      %14 = sbr.rel (0) target = $region13
    $region12: #{tpu_custom_call.1} parent=1 // pred_region
      _
    $region13: #{tpu_custom_call.1} parent=1 // pred_fallthru
      _
    %p16 = scmp.eq.s32.totalorder 0, 0
    // Predicated region
    $region14: #{tpu_custom_call.1} parent=1 // pred_check
      %p17 = pneg %p16
    $region15: #{tpu_custom_call.1} parent=1 // pred_check_branch
      %19 = sbr.rel (%p17) target = $region17
    $region16: #{tpu_custom_call.1} parent=1 // pred_region
      %v20 = vld [vmem:[%s1] sm:$0xff]
      %v21 = vmul.f32 %v20, %v20
      %vm22 = vcmask 523264
      %v23 = vsel %vm22, %v21, 0.0
      %24 = vadd.xlane.f32.xlu0 %v23
      %v25 = vpop.xlane.xlu0 %24
      %v26 = vmax.f32 %v25, 1e-24
      %v27 = vrsqrt.pop %v26
      %v28 = vmul.f32 %v20, %v27
      %v29 = vpack.c.bf16 %v28, %v28
      %vm30 = vcmask 519168
      %31 = vst.msk [vmem:[#allocation2] sm:$0xf] %vm30, %v29
    $region17: #{tpu_custom_call.1} parent=1 // pred_fallthru
      _
    %v32 = vld [vmem:[%s2] sm:$0xff]
    %v33 = vld [vmem:[%s2 + $0x8] sm:$0xff]
    %v34 = vld [vmem:[%s2 + $0x10] sm:$0xff]
    %v35 = vld [vmem:[%s2 + $0x18] sm:$0xff]
    %v36 = vld [vmem:[%s2 + $0x20] sm:$0xff]
    %v37 = vld [vmem:[%s2 + $0x28] sm:$0xff]
    %v38 = vld [vmem:[%s2 + $0x30] sm:$0xff]
    %v39 = vld [vmem:[%s2 + $0x38] sm:$0xff]
    %v40 = vld [vmem:[%s2 + $0x40] sm:$0xff]
    %v41 = vld [vmem:[%s2 + $0x48] sm:$0xff]
    %v42 = vld [vmem:[%s2 + $0x50] sm:$0xff]
    %v43 = vld [vmem:[%s2 + $0x58] sm:$0xff]
    %v44 = vld [vmem:[%s2 + $0x60] sm:$0xff]
    %v45 = vld [vmem:[%s2 + $0x68] sm:$0xff]
    %v46 = vld [vmem:[%s2 + $0x70] sm:$0xff]
    %v47 = vld [vmem:[%s2 + $0x78] sm:$0xff]
    %v48 = vmul.f32 %v32, %v32
    %v49 = vmul.f32 %v33, %v33
    %v50 = vmul.f32 %v34, %v34
    %v51 = vmul.f32 %v35, %v35
    %v52 = vmul.f32 %v36, %v36
    %v53 = vmul.f32 %v37, %v37
    %v54 = vmul.f32 %v38, %v38
    %v55 = vmul.f32 %v39, %v39
    %v56 = vmul.f32 %v40, %v40
    %v57 = vmul.f32 %v41, %v41
    %v58 = vmul.f32 %v42, %v42
    %v59 = vmul.f32 %v43, %v43
    %v60 = vmul.f32 %v44, %v44
    %v61 = vmul.f32 %v45, %v45
    %v62 = vmul.f32 %v46, %v46
    %v63 = vmul.f32 %v47, %v47
    %vm64 = vcmask 523264
    %v65 = vsel %vm64, %v48, 0.0
    %66 = vadd.xlane.f32.xlu0 %v65
    %v67 = vpop.xlane.xlu0 %66
    %v68 = vsel %vm64, %v49, 0.0
    %69 = vadd.xlane.f32.xlu0 %v68
    %v70 = vpop.xlane.xlu0 %69
    %v71 = vsel %vm64, %v50, 0.0
    %72 = vadd.xlane.f32.xlu0 %v71
    %v73 = vpop.xlane.xlu0 %72
    %v74 = vsel %vm64, %v51, 0.0
    %75 = vadd.xlane.f32.xlu0 %v74
    %v76 = vpop.xlane.xlu0 %75
    %v77 = vsel %vm64, %v52, 0.0
    %78 = vadd.xlane.f32.xlu0 %v77
    %v79 = vpop.xlane.xlu0 %78
    %v80 = vsel %vm64, %v53, 0.0
    %81 = vadd.xlane.f32.xlu0 %v80
    %v82 = vpop.xlane.xlu0 %81
    %v83 = vsel %vm64, %v54, 0.0
    %84 = vadd.xlane.f32.xlu0 %v83
    %v85 = vpop.xlane.xlu0 %84
    %v86 = vsel %vm64, %v55, 0.0
    %87 = vadd.xlane.f32.xlu0 %v86
    %v88 = vpop.xlane.xlu0 %87
    %v89 = vsel %vm64, %v56, 0.0
    %90 = vadd.xlane.f32.xlu0 %v89
    %v91 = vpop.xlane.xlu0 %90
    %v92 = vsel %vm64, %v57, 0.0
    %93 = vadd.xlane.f32.xlu0 %v92
    %v94 = vpop.xlane.xlu0 %93
    %v95 = vsel %vm64, %v58, 0.0
    %96 = vadd.xlane.f32.xlu0 %v95
    %v97 = vpop.xlane.xlu0 %96
    %v98 = vsel %vm64, %v59, 0.0
    %99 = vadd.xlane.f32.xlu0 %v98
    %v100 = vpop.xlane.xlu0 %99
    %v101 = vsel %vm64, %v60, 0.0
    %102 = vadd.xlane.f32.xlu0 %v101
    %v103 = vpop.xlane.xlu0 %102
    %v104 = vsel %vm64, %v61, 0.0
    %105 = vadd.xlane.f32.xlu0 %v104
    %v106 = vpop.xlane.xlu0 %105
    %v107 = vsel %vm64, %v62, 0.0
    %108 = vadd.xlane.f32.xlu0 %v107
    %v109 = vpop.xlane.xlu0 %108
    %v110 = vsel %vm64, %v63, 0.0
    %111 = vadd.xlane.f32.xlu0 %v110
    %v112 = vpop.xlane.xlu0 %111
    %v113 = vmax.f32 %v67, 1e-24
    %v114 = vmax.f32 %v70, 1e-24
    %v115 = vmax.f32 %v73, 1e-24
    %v116 = vmax.f32 %v76, 1e-24
    %v117 = vmax.f32 %v79, 1e-24
    %v118 = vmax.f32 %v82, 1e-24
    %v119 = vmax.f32 %v85, 1e-24
    %v120 = vmax.f32 %v88, 1e-24
    %v121 = vmax.f32 %v91, 1e-24
    %v122 = vmax.f32 %v94, 1e-24
    %v123 = vmax.f32 %v97, 1e-24
    %v124 = vmax.f32 %v100, 1e-24
    %v125 = vmax.f32 %v103, 1e-24
    %v126 = vmax.f32 %v106, 1e-24
    %v127 = vmax.f32 %v109, 1e-24
    %v128 = vmax.f32 %v112, 1e-24
    %v129 = vrsqrt.pop %v113
    %v130 = vrsqrt.pop %v114
    %v131 = vrsqrt.pop %v115
    %v132 = vrsqrt.pop %v116
    %v133 = vrsqrt.pop %v117
    %v134 = vrsqrt.pop %v118
    %v135 = vrsqrt.pop %v119
    %v136 = vrsqrt.pop %v120
    %v137 = vrsqrt.pop %v121
    %v138 = vrsqrt.pop %v122
    %v139 = vrsqrt.pop %v123
    %v140 = vrsqrt.pop %v124
    %v141 = vrsqrt.pop %v125
    %v142 = vrsqrt.pop %v126
    %v143 = vrsqrt.pop %v127
    %v144 = vrsqrt.pop %v128
    %v145 = vmul.f32 %v32, %v129
    %v146 = vmul.f32 %v33, %v130
    %v147 = vmul.f32 %v34, %v131
    %v148 = vmul.f32 %v35, %v132
    %v149 = vmul.f32 %v36, %v133
    %v150 = vmul.f32 %v37, %v134
    %v151 = vmul.f32 %v38, %v135
    %v152 = vmul.f32 %v39, %v136
    %v153 = vmul.f32 %v40, %v137
    %v154 = vmul.f32 %v41, %v138
    %v155 = vmul.f32 %v42, %v139
    %v156 = vmul.f32 %v43, %v140
    %v157 = vmul.f32 %v44, %v141
    %v158 = vmul.f32 %v45, %v142
    %v159 = vmul.f32 %v46, %v143
    %v160 = vmul.f32 %v47, %v144
    %v161 = vpack.c.bf16 %v146, %v145
    %v162 = vpack.c.bf16 %v148, %v147
    %v163 = vpack.c.bf16 %v150, %v149
    %v164 = vpack.c.bf16 %v152, %v151
    %v165 = vpack.c.bf16 %v154, %v153
    %v166 = vpack.c.bf16 %v156, %v155
    %v167 = vpack.c.bf16 %v158, %v157
    %v168 = vpack.c.bf16 %v160, %v159
    %v169 = vld [vmem:[#allocation2] sm:$0xf]
    %v171 = vsel %vm64, %v169, 0
    %v174 = vsel %vm64, %v161, 0
    %v177 = vsel %vm64, %v162, 0
    %v180 = vsel %vm64, %v163, 0
    %v183 = vsel %vm64, %v164, 0
    %v186 = vsel %vm64, %v165, 0
    %v189 = vsel %vm64, %v166, 0
    %v192 = vsel %vm64, %v167, 0
    %v195 = vsel %vm64, %v168, 0
    %197 = vmatprep.subr.bf16.mxu0 0
    %198 = vmatpush1.bf16.xpose.msra.mxu0 %v174
    %199 = vmatprep.subr.bf16.mxu0 0
    %200 = vmatpush1.bf16.xpose.msra.mxu0 %v177
    %201 = vmatprep.subr.bf16.mxu0 0
    %202 = vmatpush1.bf16.xpose.msra.mxu0 %v180
    %203 = vmatprep.subr.bf16.mxu0 0
    %204 = vmatpush1.bf16.xpose.msra.mxu0 %v183
    %205 = vmatprep.subr.bf16.mxu0 0
    %206 = vmatpush1.bf16.xpose.msra.mxu0 %v186
    %207 = vmatprep.subr.bf16.mxu0 0
    %208 = vmatpush1.bf16.xpose.msra.mxu0 %v189
    %209 = vmatprep.subr.bf16.mxu0 0
    %210 = vmatpush1.bf16.xpose.msra.mxu0 %v192
    %211 = vmatprep.subr.bf16.mxu0 0
    %212 = vmatpush1.bf16.xpose.msra.mxu0 %v195
    %213 = vmatprep.subr.bf16.mxu0 0
    %214 = vmatpush1.bf16.xpose.msra.mxu0 0
    %215 = vmatprep.subr.bf16.mxu0 0
    %216 = vmatpush1.bf16.xpose.msra.mxu0 0
    %217 = vmatprep.subr.bf16.mxu0 0
    %218 = vmatpush1.bf16.xpose.msra.mxu0 0
    %219 = vmatprep.subr.bf16.mxu0 0
    %220 = vmatpush1.bf16.xpose.msra.mxu0 0
    %221 = vmatprep.subr.bf16.mxu0 0
    %222 = vmatpush1.bf16.xpose.msra.mxu0 0
    %223 = vmatprep.subr.bf16.mxu0 0
    %224 = vmatpush1.bf16.xpose.msra.mxu0 0
    %225 = vmatprep.subr.bf16.mxu0 0
    %226 = vmatpush1.bf16.xpose.msra.mxu0 0
    %227 = vmatprep.subr.bf16.mxu0 0
    %228 = vmatpush1.bf16.xpose.msra.mxu0 0
    %229 = vmatprep.mubr.bf16.mxu0 0
    %230 = vmatmul.mubr.bf16.gmra.mrb[0].mxu0 %v171
    %v231 = vpop.f32.mrb[0].mxu0
    %v232 = vadd.f32 0.0, %v231
    %v233 = vpop.f32.mrb[0].mxu0
    %v234 = vpop.f32.mrb[0].mxu0
    %v235 = vpop.f32.mrb[0].mxu0
    %236 = vdwg.mxu0
    %v237 = vlaneseq
    %v238 = vand.u32 %v237, 127
    %s239 = smul.u32 0, 128
    %v240 = vstv %s239
    %v241 = vadd.s32 %v238, %v240
    %v242 = vld [vmem:[%s0] sm:$0xff]
    %243 = vset.pattern.permute.xlu0 0
    %244 = vperm.xlu0 %243, %v242
    %v245 = vpop.permute.xlu0 %244
    %vm246 = vcmp.eq.s32.totalorder %v241, %v245
    %v247 = vsel %vm246, 1, 0
    %v248 = vcvt.s32.f32 %v247
    %v249 = vmul.f32 %v248, %v232
    %250 = vadd.xlane.f32.xlu0 %v249
    %v251 = vpop.xlane.xlu0 %250
    %v252 = vmul.f32 %v251, %v251
    %v253 = vsub.f32 1.0, %v252
    %v254 = vmax.f32 %v253, 0.0
    %v255 = vrsqrt.pop %v254
    %v256 = vmul.f32 %v254, %v255
    %vm257 = vcmp.eq.f32.partialorder %v254, inf
    %v258 = vsel %vm257, %v254, %v256
    %vm259 = vcmp.eq.f32.partialorder %v254, 0.0
    %v260 = vand.u32 %v254, 2147483648
    %v261 = vsel %vm259, %v260, %v258
    %v262 = vmul.f32 %v251, 0.87758255
    %v263 = vmul.f32 %v261, 0.47942555
    %v264 = vsub.f32 %v262, %v263
    %vm265 = vcmp.gt.f32.partialorder %v251, -0.87758255
    %v266 = vsub.f32 %v251, 0.23971277
    %v267 = vsel %vm265, %v264, %v266
    %v268 = vsub.f32 %v267, %v251
    %v269 = vmul.f32 %v248, %v268
    %v270 = vadd.f32 %v232, %v269
    %v271 = vmul.f32 %v270, 30.0
    %272 = vst [vmem:[#allocation3] sm:$0xff] %v271
    // Predicated region
    $region18: #{tpu_custom_call.1} parent=1 // pred_check
      _
    $region19: #{tpu_custom_call.1} parent=1 // pred_check_branch
      %274 = sbr.rel (0) target = $region21
    $region20: #{tpu_custom_call.1} parent=1 // pred_region
      %s276 = ssub.s32 128, 128
      %277 = vsyncadd [#allocation4], %s276
      %s279 = sshll.u32 [#allocation3], 4
      %s280 = int_to_ptr.vmem [resolvable:$true] %s279
      %282 = dma.vmem_to_hbm [thread:$0]  %s280, 128, %s3, [#allocation4]
    $region21: #{tpu_custom_call.1} parent=1 // pred_fallthru
      _
    // Predicated region
    $region22: #{tpu_custom_call.1} parent=1 // pred_check
      _
    $region23: #{tpu_custom_call.1} parent=1 // pred_check_branch
      %284 = sbr.rel (0) target = $region25
    $region24: #{tpu_custom_call.1} parent=1 // pred_region
      %285 = dma.done [#allocation4], 128
    $region25: #{tpu_custom_call.1} parent=1 // pred_fallthru
      _
    %286 = vsyncpa [#allocation4], 1

</llo_original>
